<compile_context>
chip_gen: v5e
topology: v5e:2x2
jax: 0.10.0
libtpu: 0.0.40
codegen_flags: <defaults>
</compile_context>

<pallas_src>
import jax
import jax.numpy as jnp
from jax.experimental import pallas as pl
from jax.experimental.pallas import tpu as pltpu

HIDDEN = 128       # padded hidden width (lane-dense)
HIDDEN_REAL = 64   # logical (PyTorch) hidden width


def _round_up(x, m):
    return (x + m - 1) // m * m


def _softq_kernel(s_ref, a_ref,
                  w1s_ref, w1a_ref, b1_ref,
                  w2_ref, b2_ref,
                  w3_ref, b3_ref,
                  w4_ref, b4_ref,
                  w5_ref, b5_ref,
                  o_ref):
    # Fused "concat + linear1":  cat([s, a], 1) @ W1  ==  s @ W1[:sd] + a @ W1[sd:]
    s = s_ref[...].astype(jnp.bfloat16)   # no-op if the caller already supplies bf16
    a = a_ref[...].astype(jnp.bfloat16)
    h = (jnp.dot(s, w1s_ref[...], preferred_element_type=jnp.float32)
         + jnp.dot(a, w1a_ref[...], preferred_element_type=jnp.float32))
    # bf16 epilogue: bias add + ReLU in bf16; next matmul consumes bf16 directly.
    h = jnp.maximum(h.astype(jnp.bfloat16) + b1_ref[...], 0.0)

    def dense_relu(h_bf16, w_ref, b_ref):
        y = jnp.dot(h_bf16, w_ref[...], preferred_element_type=jnp.float32)
        return jnp.maximum(y.astype(jnp.bfloat16) + b_ref[...], 0.0)

    h = dense_relu(h, w2_ref, b2_ref)   # linear2 + ReLU
    h = dense_relu(h, w3_ref, b3_ref)   # linear3 + ReLU

    # linear4 + Hardswish, kept in f32 (feeds the final reduce directly).
    # hardswish(z) = z * clamp(z + 3, 0, 6) / 6 ; the 1/6 is folded into w5 at pack time.
    z = jnp.dot(h, w4_ref[...], preferred_element_type=jnp.float32) + b4_ref[...]
    hw = z * jnp.clip(z + 3.0, 0.0, 6.0)

    # linear5 (128 -> 1): VPU multiply + lane reduction instead of an N=1 MXU matmul.
    out = jnp.sum(hw * w5_ref[...], axis=-1, keepdims=True) + b5_ref[...]
    o_ref[...] = out.astype(o_ref.dtype)


def soft_q_net(state, action, packed, *, block_rows=2048, core_parallel=False):
    """Forward pass. `packed` comes from pack_params().

    `state`/`action` may be f32 or bf16 (bf16 halves the dominant input HBM stream and
    skips the in-kernel cast).  Set core_parallel=True on v7x to shard the batch-grid
    axis across both TensorCores (no-op benefit on single-TC v5e/v6e).
    """
    B, state_dim = state.shape
    action_dim = action.shape[1]

    # Adaptive batch tiling: split B into cdiv(B, block_rows) near-equal blocks and round
    # each block up to a multiple of 8 sublanes (<8 padded rows per block instead of
    # rounding B up to a full fixed tile).
    num_blocks = -(-B // block_rows)
    tm = _round_up(-(-B // num_blocks), 8)
    Bp = num_blocks * tm
    if Bp != B:
        state = jnp.pad(state, ((0, Bp - B), (0, 0)))
        action = jnp.pad(action, ((0, Bp - B), (0, 0)))
    grid = (num_blocks,)

    def row_spec(d):
        return pl.BlockSpec((tm, d), lambda i: (i, 0))

    def const_spec(shape):
        return pl.BlockSpec(shape, lambda i: (0, 0))   # weights stay VMEM-resident

    operands = (state, action,
                packed["w1s"], packed["w1a"], packed["b1"],
                packed["w2"], packed["b2"],
                packed["w3"], packed["b3"],
                packed["w4"], packed["b4"],
                packed["w5"], packed["b5"])

    in_specs = [
        row_spec(state_dim), row_spec(action_dim),
        const_spec((state_dim, HIDDEN)), const_spec((action_dim, HIDDEN)), const_spec((1, HIDDEN)),
        const_spec((HIDDEN, HIDDEN)), const_spec((1, HIDDEN)),
        const_spec((HIDDEN, HIDDEN)), const_spec((1, HIDDEN)),
        const_spec((HIDDEN, HIDDEN)), const_spec((1, HIDDEN)),
        const_spec((1, HIDDEN)), const_spec((1, 1)),
    ]

    in_dim = state_dim + action_dim
    flops = 2 * Bp * (in_dim * HIDDEN + 3 * HIDDEN * HIDDEN + HIDDEN)
    weight_bytes = (in_dim * HIDDEN + 3 * HIDDEN * HIDDEN) * 2 + (5 * HIDDEN + 1) * 4
    bytes_accessed = Bp * (in_dim + 1) * 4 + weight_bytes

    # "parallel" is safe everywhere; CORE_PARALLEL is what actually shards the grid
    # across v7x's two TensorCores (opt-in to avoid relying on v7x-only lowering).
    semantics = (pltpu.CORE_PARALLEL,) if core_parallel else ("parallel",)

    out = pl.pallas_call(
        _softq_kernel,
        out_shape=jax.ShapeDtypeStruct((Bp, 1), jnp.float32),
        grid=grid,
        in_specs=in_specs,
        out_specs=pl.BlockSpec((tm, 1), lambda i: (i, 0)),
        compiler_params=pltpu.CompilerParams(
            dimension_semantics=semantics,
            vmem_limit_bytes=32 * 1024 * 1024),
        cost_estimate=pl.CostEstimate(
            flops=flops, transcendentals=0, bytes_accessed=bytes_accessed),
    )(*operands)
    return out[:B]


def init_params(key, state_dim, action_dim):
    """Matches nn.Linear default init U(-1/sqrt(fan_in), +1/sqrt(fan_in)).
    Weights stored transposed: (in_features, out_features); biases (1, out)."""
    dims = [(state_dim + action_dim, HIDDEN_REAL),
            (HIDDEN_REAL, HIDDEN_REAL),
            (HIDDEN_REAL, HIDDEN_REAL),
            (HIDDEN_REAL, HIDDEN_REAL),
            (HIDDEN_REAL, 1)]
    params = {}
    for i, (fan_in, fan_out) in enumerate(dims, start=1):
        key, kw, kb = jax.random.split(key, 3)
        bound = 1.0 / float(fan_in) ** 0.5
        params[f"w{i}"] = jax.random.uniform(
            kw, (fan_in, fan_out), jnp.float32, minval=-bound, maxval=bound)
        params[f"b{i}"] = jax.random.uniform(
            kb, (1, fan_out), jnp.float32, minval=-bound, maxval=bound)
    return params


def pack_params(params, state_dim):
    """Split W1 by (state, action), zero-pad hidden 64 -> 128 (lane-dense), cast MXU
    weights to bf16.  Biases b1-b3 are bf16 (bf16 epilogue); b4/b5 stay f32.  The
    hardswish 1/6 is folded into w5.  Zero padding is exact: padded lanes stay 0
    through ReLU / Hardswish and w5."""
    def pad(x, rows, cols):
        return jnp.zeros((rows, cols), jnp.float32).at[:x.shape[0], :x.shape[1]].set(x)

    w1 = params["w1"]
    action_rows = w1.shape[0] - state_dim
    return {
        "w1s": pad(w1[:state_dim], state_dim, HIDDEN).astype(jnp.bfloat16),
        "w1a": pad(w1[state_dim:], action_rows, HIDDEN).astype(jnp.bfloat16),
        "b1": pad(params["b1"], 1, HIDDEN).astype(jnp.bfloat16),
        "w2": pad(params["w2"], HIDDEN, HIDDEN).astype(jnp.bfloat16),
        "b2": pad(params["b2"], 1, HIDDEN).astype(jnp.bfloat16),
        "w3": pad(params["w3"], HIDDEN, HIDDEN).astype(jnp.bfloat16),
        "b3": pad(params["b3"], 1, HIDDEN).astype(jnp.bfloat16),
        "w4": pad(params["w4"], HIDDEN, HIDDEN).astype(jnp.bfloat16),
        "b4": pad(params["b4"], 1, HIDDEN),                     # f32 (hardswish in f32)
        "w5": pad(params["w5"].T, 1, HIDDEN) * (1.0 / 6.0),     # (1, 128) row, 1/6 folded in
        "b5": params["b5"],                                     # (1, 1) f32
    }


def _reference(state, action, params):
    """Pure-JAX f32 reference matching the original PyTorch module math."""
    x = jnp.concatenate([state, action], axis=1)
    h = jnp.maximum(x @ params["w1"] + params["b1"], 0.0)
    h = jnp.maximum(h @ params["w2"] + params["b2"], 0.0)
    h = jnp.maximum(h @ params["w3"] + params["b3"], 0.0)
    z = h @ params["w4"] + params["b4"]
    h = z * jnp.clip(z + 3.0, 0.0, 6.0) / 6.0
    return h @ params["w5"] + params["b5"]


if __name__ == "__main__":
    key = jax.random.PRNGKey(0)
    B, state_dim, action_dim = 8, 16, 8

    key, ks, ka, kp = jax.random.split(key, 4)
    state = jax.random.normal(ks, (B, state_dim), jnp.float32)
    action = jax.random.normal(ka, (B, action_dim), jnp.float32)
    params = init_params(kp, state_dim, action_dim)
    packed = pack_params(params, state_dim)

    out = soft_q_net(state, action, packed)
    out = jax.block_until_ready(out)

    ref = _reference(state, action, params)
    assert out.shape == (B, 1)
    # bf16 MXU operands + bf16 hidden activations (f32 accumulate / f32 final layer)
    # => modest tolerance vs. the pure-f32 reference.
    assert jnp.allclose(out, ref, atol=2e-2, rtol=2e-2), "mismatch vs reference"

    print("KERNEL_OK")
</pallas_src>

<mosaic_0001>
module attributes {stable_mosaic.version = 11 : i64} {
  func.func @_softq_kernel(%arg0: i32, %arg1: memref<8x16xf32, #tpu.memory_space<vmem>>, %arg2: memref<8x8xf32, #tpu.memory_space<vmem>>, %arg3: memref<16x128xbf16, #tpu.memory_space<vmem>>, %arg4: memref<8x128xbf16, #tpu.memory_space<vmem>>, %arg5: memref<1x128xbf16, #tpu.memory_space<vmem>>, %arg6: memref<128x128xbf16, #tpu.memory_space<vmem>>, %arg7: memref<1x128xbf16, #tpu.memory_space<vmem>>, %arg8: memref<128x128xbf16, #tpu.memory_space<vmem>>, %arg9: memref<1x128xbf16, #tpu.memory_space<vmem>>, %arg10: memref<128x128xbf16, #tpu.memory_space<vmem>>, %arg11: memref<1x128xf32, #tpu.memory_space<vmem>>, %arg12: memref<1x128xf32, #tpu.memory_space<vmem>>, %arg13: memref<1x1xf32, #tpu.memory_space<vmem>>, %arg14: memref<8x1xf32, #tpu.memory_space<vmem>>) attributes {dimension_semantics = [#tpu.dimension_semantics<parallel>], iteration_bounds = array<i64: 1>, scalar_prefetch = 0 : i64, scratch_operands = 0 : i64, tpu.core_type = #tpu.core_type<tc>, window_params = [{transform_indices = @transform_0, window_bounds = array<i64: 8, 16>}, {transform_indices = @transform_1, window_bounds = array<i64: 8, 8>}, {pipeline_mode = #tpu.pipeline_mode<synchronous>, transform_indices = @transform_2, window_bounds = array<i64: 16, 128>}, {pipeline_mode = #tpu.pipeline_mode<synchronous>, transform_indices = @transform_3, window_bounds = array<i64: 8, 128>}, {pipeline_mode = #tpu.pipeline_mode<synchronous>, transform_indices = @transform_4, window_bounds = array<i64: 1, 128>}, {pipeline_mode = #tpu.pipeline_mode<synchronous>, transform_indices = @transform_5, window_bounds = array<i64: 128, 128>}, {pipeline_mode = #tpu.pipeline_mode<synchronous>, transform_indices = @transform_6, window_bounds = array<i64: 1, 128>}, {pipeline_mode = #tpu.pipeline_mode<synchronous>, transform_indices = @transform_7, window_bounds = array<i64: 128, 128>}, {pipeline_mode = #tpu.pipeline_mode<synchronous>, transform_indices = @transform_8, window_bounds = array<i64: 1, 128>}, {pipeline_mode = #tpu.pipeline_mode<synchronous>, transform_indices = @transform_9, window_bounds = array<i64: 128, 128>}, {pipeline_mode = #tpu.pipeline_mode<synchronous>, transform_indices = @transform_10, window_bounds = array<i64: 1, 128>}, {pipeline_mode = #tpu.pipeline_mode<synchronous>, transform_indices = @transform_11, window_bounds = array<i64: 1, 128>}, {pipeline_mode = #tpu.pipeline_mode<synchronous>, transform_indices = @transform_12, window_bounds = array<i64: 1, 1>}, {transform_indices = @transform_13, window_bounds = array<i64: 8, 1>}]} {
    %c0 = arith.constant 0 : index
    %c0_0 = arith.constant 0 : index
    %0 = vector.load %arg1[%c0, %c0_0] : memref<8x16xf32, #tpu.memory_space<vmem>>, vector<8x16xf32>
    %1 = arith.truncf %0 : vector<8x16xf32> to vector<8x16xbf16>
    %c0_1 = arith.constant 0 : index
    %c0_2 = arith.constant 0 : index
    %2 = vector.load %arg2[%c0_1, %c0_2] : memref<8x8xf32, #tpu.memory_space<vmem>>, vector<8x8xf32>
    %3 = arith.truncf %2 : vector<8x8xf32> to vector<8x8xbf16>
    %c0_3 = arith.constant 0 : index
    %c0_4 = arith.constant 0 : index
    %4 = vector.load %arg3[%c0_3, %c0_4] : memref<16x128xbf16, #tpu.memory_space<vmem>>, vector<16x128xbf16>
    %cst = arith.constant dense<0.000000e+00> : vector<8x128xf32>
    %5 = tpu.matmul %1, %4, %cst {dimension_numbers = #tpu.dot_dimension_numbers<[1], [0], [0], [1], [0, 0, 1, 1], [], []>} : vector<8x16xbf16>, vector<16x128xbf16>, vector<8x128xf32> -> vector<8x128xf32>
    %c0_5 = arith.constant 0 : index
    %c0_6 = arith.constant 0 : index
    %6 = vector.load %arg4[%c0_5, %c0_6] : memref<8x128xbf16, #tpu.memory_space<vmem>>, vector<8x128xbf16>
    %cst_7 = arith.constant dense<0.000000e+00> : vector<8x128xf32>
    %7 = tpu.matmul %3, %6, %cst_7 {dimension_numbers = #tpu.dot_dimension_numbers<[1], [0], [0], [1], [0, 0, 1, 1], [], []>} : vector<8x8xbf16>, vector<8x128xbf16>, vector<8x128xf32> -> vector<8x128xf32>
    %8 = arith.addf %5, %7 : vector<8x128xf32>
    %9 = arith.truncf %8 : vector<8x128xf32> to vector<8x128xbf16>
    %c0_8 = arith.constant 0 : index
    %c0_9 = arith.constant 0 : index
    %10 = vector.load %arg5[%c0_8, %c0_9] : memref<1x128xbf16, #tpu.memory_space<vmem>>, vector<1x128xbf16>
    %11 = vector.broadcast %10 : vector<1x128xbf16> to vector<8x128xbf16>
    %12 = arith.addf %9, %11 : vector<8x128xbf16>
    %cst_10 = arith.constant 0.000000e+00 : bf16
    %13 = vector.broadcast %cst_10 : bf16 to vector<8x128xbf16>
    %14 = arith.maximumf %12, %13 : vector<8x128xbf16>
    %c0_11 = arith.constant 0 : index
    %c0_12 = arith.constant 0 : index
    %15 = vector.load %arg6[%c0_11, %c0_12] : memref<128x128xbf16, #tpu.memory_space<vmem>>, vector<128x128xbf16>
    %cst_13 = arith.constant dense<0.000000e+00> : vector<8x128xf32>
    %16 = tpu.matmul %14, %15, %cst_13 {dimension_numbers = #tpu.dot_dimension_numbers<[1], [0], [0], [1], [0, 0, 1, 1], [], []>} : vector<8x128xbf16>, vector<128x128xbf16>, vector<8x128xf32> -> vector<8x128xf32>
    %17 = arith.truncf %16 : vector<8x128xf32> to vector<8x128xbf16>
    %c0_14 = arith.constant 0 : index
    %c0_15 = arith.constant 0 : index
    %18 = vector.load %arg7[%c0_14, %c0_15] : memref<1x128xbf16, #tpu.memory_space<vmem>>, vector<1x128xbf16>
    %19 = vector.broadcast %18 : vector<1x128xbf16> to vector<8x128xbf16>
    %20 = arith.addf %17, %19 : vector<8x128xbf16>
    %cst_16 = arith.constant 0.000000e+00 : bf16
    %21 = vector.broadcast %cst_16 : bf16 to vector<8x128xbf16>
    %22 = arith.maximumf %20, %21 : vector<8x128xbf16>
    %c0_17 = arith.constant 0 : index
    %c0_18 = arith.constant 0 : index
    %23 = vector.load %arg8[%c0_17, %c0_18] : memref<128x128xbf16, #tpu.memory_space<vmem>>, vector<128x128xbf16>
    %cst_19 = arith.constant dense<0.000000e+00> : vector<8x128xf32>
    %24 = tpu.matmul %22, %23, %cst_19 {dimension_numbers = #tpu.dot_dimension_numbers<[1], [0], [0], [1], [0, 0, 1, 1], [], []>} : vector<8x128xbf16>, vector<128x128xbf16>, vector<8x128xf32> -> vector<8x128xf32>
    %25 = arith.truncf %24 : vector<8x128xf32> to vector<8x128xbf16>
    %c0_20 = arith.constant 0 : index
    %c0_21 = arith.constant 0 : index
    %26 = vector.load %arg9[%c0_20, %c0_21] : memref<1x128xbf16, #tpu.memory_space<vmem>>, vector<1x128xbf16>
    %27 = vector.broadcast %26 : vector<1x128xbf16> to vector<8x128xbf16>
    %28 = arith.addf %25, %27 : vector<8x128xbf16>
    %cst_22 = arith.constant 0.000000e+00 : bf16
    %29 = vector.broadcast %cst_22 : bf16 to vector<8x128xbf16>
    %30 = arith.maximumf %28, %29 : vector<8x128xbf16>
    %c0_23 = arith.constant 0 : index
    %c0_24 = arith.constant 0 : index
    %31 = vector.load %arg10[%c0_23, %c0_24] : memref<128x128xbf16, #tpu.memory_space<vmem>>, vector<128x128xbf16>
    %cst_25 = arith.constant dense<0.000000e+00> : vector<8x128xf32>
    %32 = tpu.matmul %30, %31, %cst_25 {dimension_numbers = #tpu.dot_dimension_numbers<[1], [0], [0], [1], [0, 0, 1, 1], [], []>} : vector<8x128xbf16>, vector<128x128xbf16>, vector<8x128xf32> -> vector<8x128xf32>
    %c0_26 = arith.constant 0 : index
    %c0_27 = arith.constant 0 : index
    %33 = vector.load %arg11[%c0_26, %c0_27] : memref<1x128xf32, #tpu.memory_space<vmem>>, vector<1x128xf32>
    %34 = vector.broadcast %33 : vector<1x128xf32> to vector<8x128xf32>
    %35 = arith.addf %32, %34 : vector<8x128xf32>
    %cst_28 = arith.constant 3.000000e+00 : f32
    %36 = vector.broadcast %cst_28 : f32 to vector<8x128xf32>
    %37 = arith.addf %35, %36 : vector<8x128xf32>
    %cst_29 = arith.constant 0.000000e+00 : f32
    %cst_30 = arith.constant 6.000000e+00 : f32
    %38 = vector.broadcast %cst_29 : f32 to vector<8x128xf32>
    %39 = arith.maximumf %38, %37 : vector<8x128xf32>
    %40 = vector.broadcast %cst_30 : f32 to vector<8x128xf32>
    %41 = arith.minimumf %40, %39 : vector<8x128xf32>
    %42 = arith.mulf %35, %41 : vector<8x128xf32>
    %c0_31 = arith.constant 0 : index
    %c0_32 = arith.constant 0 : index
    %43 = vector.load %arg12[%c0_31, %c0_32] : memref<1x128xf32, #tpu.memory_space<vmem>>, vector<1x128xf32>
    %44 = vector.broadcast %43 : vector<1x128xf32> to vector<8x128xf32>
    %45 = arith.mulf %42, %44 : vector<8x128xf32>
    %cst_33 = arith.constant dense<0.000000e+00> : vector<8xf32>
    %46 = vector.multi_reduction <add>, %45, %cst_33 [1] : vector<8x128xf32> to vector<8xf32>
    %47 = vector.shape_cast %46 : vector<8xf32> to vector<8x1xf32>
    %c0_34 = arith.constant 0 : index
    %c0_35 = arith.constant 0 : index
    %48 = vector.load %arg13[%c0_34, %c0_35] : memref<1x1xf32, #tpu.memory_space<vmem>>, vector<1x1xf32>
    %49 = vector.broadcast %48 : vector<1x1xf32> to vector<8x1xf32>
    %50 = arith.addf %47, %49 : vector<8x1xf32>
    %c0_36 = arith.constant 0 : index
    %c0_37 = arith.constant 0 : index
    %51 = vector.load %arg14[%c0_36, %c0_37] : memref<8x1xf32, #tpu.memory_space<vmem>>, vector<8x1xf32>
    tpu.vector_store %arg14[%c0_36, %c0_37], %50 {strides = array<i32>} : memref<8x1xf32, #tpu.memory_space<vmem>>, vector<8x1xf32>,
    return
  }
  func.func @transform_0(%arg0: i32) -> (i32, i32) {
    %c0_i32 = arith.constant 0 : i32
    %c0_i32_0 = arith.constant 0 : i32
    return %arg0, %c0_i32 : i32, i32
  }
  func.func @transform_1(%arg0: i32) -> (i32, i32) {
    %c0_i32 = arith.constant 0 : i32
    %c0_i32_0 = arith.constant 0 : i32
    return %arg0, %c0_i32 : i32, i32
  }
  func.func @transform_2(%arg0: i32) -> (i32, i32) {
    %c0_i32 = arith.constant 0 : i32
    %c0_i32_0 = arith.constant 0 : i32
    %c0_i32_1 = arith.constant 0 : i32
    return %c0_i32, %c0_i32_0 : i32, i32
  }
  func.func @transform_3(%arg0: i32) -> (i32, i32) {
    %c0_i32 = arith.constant 0 : i32
    %c0_i32_0 = arith.constant 0 : i32
    %c0_i32_1 = arith.constant 0 : i32
    return %c0_i32, %c0_i32_0 : i32, i32
  }
  func.func @transform_4(%arg0: i32) -> (i32, i32) {
    %c0_i32 = arith.constant 0 : i32
    %c0_i32_0 = arith.constant 0 : i32
    %c0_i32_1 = arith.constant 0 : i32
    return %c0_i32, %c0_i32_0 : i32, i32
  }
  func.func @transform_5(%arg0: i32) -> (i32, i32) {
    %c0_i32 = arith.constant 0 : i32
    %c0_i32_0 = arith.constant 0 : i32
    %c0_i32_1 = arith.constant 0 : i32
    return %c0_i32, %c0_i32_0 : i32, i32
  }
  func.func @transform_6(%arg0: i32) -> (i32, i32) {
    %c0_i32 = arith.constant 0 : i32
    %c0_i32_0 = arith.constant 0 : i32
    %c0_i32_1 = arith.constant 0 : i32
    return %c0_i32, %c0_i32_0 : i32, i32
  }
  func.func @transform_7(%arg0: i32) -> (i32, i32) {
    %c0_i32 = arith.constant 0 : i32
    %c0_i32_0 = arith.constant 0 : i32
    %c0_i32_1 = arith.constant 0 : i32
    return %c0_i32, %c0_i32_0 : i32, i32
  }
  func.func @transform_8(%arg0: i32) -> (i32, i32) {
    %c0_i32 = arith.constant 0 : i32
    %c0_i32_0 = arith.constant 0 : i32
    %c0_i32_1 = arith.constant 0 : i32
    return %c0_i32, %c0_i32_0 : i32, i32
  }
  func.func @transform_9(%arg0: i32) -> (i32, i32) {
    %c0_i32 = arith.constant 0 : i32
    %c0_i32_0 = arith.constant 0 : i32
    %c0_i32_1 = arith.constant 0 : i32
    return %c0_i32, %c0_i32_0 : i32, i32
  }
  func.func @transform_10(%arg0: i32) -> (i32, i32) {
    %c0_i32 = arith.constant 0 : i32
    %c0_i32_0 = arith.constant 0 : i32
    %c0_i32_1 = arith.constant 0 : i32
    return %c0_i32, %c0_i32_0 : i32, i32
  }
  func.func @transform_11(%arg0: i32) -> (i32, i32) {
    %c0_i32 = arith.constant 0 : i32
    %c0_i32_0 = arith.constant 0 : i32
    %c0_i32_1 = arith.constant 0 : i32
    return %c0_i32, %c0_i32_0 : i32, i32
  }
  func.func @transform_12(%arg0: i32) -> (i32, i32) {
    %c0_i32 = arith.constant 0 : i32
    %c0_i32_0 = arith.constant 0 : i32
    %c0_i32_1 = arith.constant 0 : i32
    return %c0_i32, %c0_i32_0 : i32, i32
  }
  func.func @transform_13(%arg0: i32) -> (i32, i32) {
    %c0_i32 = arith.constant 0 : i32
    %c0_i32_0 = arith.constant 0 : i32
    return %arg0, %c0_i32 : i32, i32
  }
}

</mosaic_0001>

<llo_original>
// kernel: tpu_custom_call.1
$region0: #{tpu_custom_call.1}
  #allocation0 [shape = 'u32[]', space=smem, size = 0x4, offset = 0x4, fixed_abs, tag = 'smem constant byte address 0x4 - core index']
  #allocation1 [shape = 'u32[72,128]{1,0:T(1,128)}', space=vmem, size = 0x9000, scoped, tag = 'internal scratch']
  #allocation2 [shape = 'f32[1,1]{1,0:T(1,128)S(1)}', space=vmem, size = 0x200, scoped, tag = 'scoped memory for tpu_custom_call.1']
  %s0 = inlined_call_operand.hbm [shape: f32[8,16], index: 0, kind: input, shape index: {}]
  %s1 = inlined_call_operand.hbm [shape: f32[8,8], index: 1, kind: input, shape index: {}]
  %s2 = inlined_call_operand.hbm [shape: bf16[16,128], index: 2, kind: input, shape index: {}]
  %s3 = inlined_call_operand.vmem [shape: bf16[8,128], index: 3, kind: input, shape index: {}]
  %s4 = inlined_call_operand.vmem [shape: bf16[1,128], index: 4, kind: input, shape index: {}]
  %s5 = inlined_call_operand.hbm [shape: bf16[128,128], index: 5, kind: input, shape index: {}]
  %s6 = inlined_call_operand.vmem [shape: bf16[1,128], index: 6, kind: input, shape index: {}]
  %s7 = inlined_call_operand.hbm [shape: bf16[128,128], index: 7, kind: input, shape index: {}]
  %s8 = inlined_call_operand.vmem [shape: bf16[1,128], index: 8, kind: input, shape index: {}]
  %s9 = inlined_call_operand.hbm [shape: bf16[128,128], index: 9, kind: input, shape index: {}]
  %s10 = inlined_call_operand.vmem [shape: f32[1,128], index: 10, kind: input, shape index: {}]
  %s11 = inlined_call_operand.vmem [shape: f32[1,128], index: 11, kind: input, shape index: {}]
  %s12 = inlined_call_operand.<no memory space> [shape: f32[1,1], index: 12, kind: input, shape index: {}]
  %s13 = inlined_call_operand.vmem [shape: f32[8,1], index: 13, kind: output, shape index: {}]
  %s14 = sld [smem:[#allocation0]]
  $region86: #{tpu_custom_call.1} parent=0
    _
  %s16 = ssub.s32 1, %s14
  %s17 = scalar_select 0, %s16, %s14
  %v18 = vstv %s12
  %19 = vst [vmem:[#allocation2] sm:$0x1] %v18
  $region1: #{tpu_custom_call.1} parent=0
    #allocation3 [shape = 'u8[4096]{0}', space=vmem, size = 0x1000, scoped, tag = 'input window, operand 0, single buffered']
    #allocation4 [shape = 's32[1]{0}', space=sflag, size = 0x4, scoped, tag = 'scoped memory for tpu_custom_call.1']
    #allocation5 [shape = 'u8[4096]{0}', space=vmem, size = 0x1000, scoped, tag = 'input window, operand 1, single buffered']
    #allocation6 [shape = 's32[1]{0}', space=sflag, size = 0x4, scoped, tag = 'scoped memory for tpu_custom_call.1']
    #allocation7 [shape = 'u8[4096]{0}', space=vmem, size = 0x1000, scoped, tag = 'input window, operand 2, single buffered']
    #allocation8 [shape = 'u8[32768]{0}', space=vmem, size = 0x8000, scoped, tag = 'input window, operand 5, single buffered']
    #allocation9 [shape = 's32[1]{0}', space=sflag, size = 0x4, scoped, tag = 'scoped memory for tpu_custom_call.1']
    #allocation10 [shape = 'u8[32768]{0}', space=vmem, size = 0x8000, scoped, tag = 'input window, operand 7, single buffered']
    #allocation11 [shape = 'u8[32768]{0}', space=vmem, size = 0x8000, scoped, tag = 'input window, operand 9, single buffered']
    #allocation12 [shape = 's32[1]{0}', space=sflag, size = 0x4, scoped, tag = 'scoped memory for tpu_custom_call.1']
    %20 = vsyncpa [#allocation4], 0
    %21 = vsyncpa [#allocation6], 0
    %22 = vsyncpa [#allocation9], 0
    %23 = vsyncpa [#allocation12], 0
    // Predicated region
    $region2: #{tpu_custom_call.1} parent=1 // pred_check
      _
    $region3: #{tpu_custom_call.1} parent=1 // pred_check_branch
      %25 = sbr.rel (0) target = $region5
    $region4: #{tpu_custom_call.1} parent=1 // pred_region
      %27 = vsyncadd [#allocation4], 0
      %s29 = sshll.u32 %s0, 4
      %s30 = int_to_ptr.hbm [resolvable:$true] %s29
      %s31 = sshll.u32 [#allocation3], 4
      %s32 = int_to_ptr.vmem [resolvable:$true] %s31
      %34 = dma.hbm_to_vmem [thread:$0]  %s30, 128, %s32, [#allocation4]
    $region5: #{tpu_custom_call.1} parent=1 // pred_fallthru
      _
    // Predicated region
    $region6: #{tpu_custom_call.1} parent=1 // pred_check
      _
    $region7: #{tpu_custom_call.1} parent=1 // pred_check_branch
      %36 = sbr.rel (0) target = $region9
    $region8: #{tpu_custom_call.1} parent=1 // pred_region
      %38 = vsyncadd [#allocation6], 0
      %s40 = sshll.u32 %s1, 4
      %s41 = int_to_ptr.hbm [resolvable:$true] %s40
      %s42 = sshll.u32 [#allocation5], 4
      %s43 = int_to_ptr.vmem [resolvable:$true] %s42
      %45 = dma.hbm_to_vmem [thread:$0]  %s41, 128, %s43, [#allocation6]
    $region9: #{tpu_custom_call.1} parent=1 // pred_fallthru
      _
    // Predicated region
    $region10: #{tpu_custom_call.1} parent=1 // pred_check
      _
    $region11: #{tpu_custom_call.1} parent=1 // pred_check_branch
      %47 = sbr.rel (0) target = $region13
    $region12: #{tpu_custom_call.1} parent=1 // pred_region
      %49 = vsyncadd [#allocation6], 0
      %s50 = sshll.u32 %s2, 4
      %s51 = int_to_ptr.hbm [resolvable:$true] %s50
      %s52 = sshll.u32 [#allocation7], 4
      %s53 = int_to_ptr.vmem [resolvable:$true] %s52
      %58 = dma.hbm_to_vmem [thread:$0]  %s51, 128, %s53, [#allocation6], 64, 64, 4
    $region13: #{tpu_custom_call.1} parent=1 // pred_fallthru
      _
    // Predicated region
    $region14: #{tpu_custom_call.1} parent=1 // pred_check
      _
    $region15: #{tpu_custom_call.1} parent=1 // pred_check_branch
      %60 = sbr.rel (0) target = $region17
    $region16: #{tpu_custom_call.1} parent=1 // pred_region
      _
    $region17: #{tpu_custom_call.1} parent=1 // pred_fallthru
      _
    // Predicated region
    $region18: #{tpu_custom_call.1} parent=1 // pred_check
      _
    $region19: #{tpu_custom_call.1} parent=1 // pred_check_branch
      %62 = sbr.rel (0) target = $region21
    $region20: #{tpu_custom_call.1} parent=1 // pred_region
      _
    $region21: #{tpu_custom_call.1} parent=1 // pred_fallthru
      _
    // Predicated region
    $region22: #{tpu_custom_call.1} parent=1 // pred_check
      _
    $region23: #{tpu_custom_call.1} parent=1 // pred_check_branch
      %64 = sbr.rel (0) target = $region25
    $region24: #{tpu_custom_call.1} parent=1 // pred_region
      %66 = vsyncadd [#allocation9], 0
      %s67 = sshll.u32 %s5, 4
      %s68 = int_to_ptr.hbm [resolvable:$true] %s67
      %s69 = sshll.u32 [#allocation8], 4
      %s70 = int_to_ptr.vmem [resolvable:$true] %s69
      %75 = dma.hbm_to_vmem [thread:$0]  %s68, 1024, %s70, [#allocation9], 64, 64, 4
    $region25: #{tpu_custom_call.1} parent=1 // pred_fallthru
      _
    // Predicated region
    $region26: #{tpu_custom_call.1} parent=1 // pred_check
      _
    $region27: #{tpu_custom_call.1} parent=1 // pred_check_branch
      %77 = sbr.rel (0) target = $region29
    $region28: #{tpu_custom_call.1} parent=1 // pred_region
      _
    $region29: #{tpu_custom_call.1} parent=1 // pred_fallthru
      _
    // Predicated region
    $region30: #{tpu_custom_call.1} parent=1 // pred_check
      _
    $region31: #{tpu_custom_call.1} parent=1 // pred_check_branch
      %79 = sbr.rel (0) target = $region33
    $region32: #{tpu_custom_call.1} parent=1 // pred_region
      %81 = vsyncadd [#allocation9], 0
      %s82 = sshll.u32 %s7, 4
      %s83 = int_to_ptr.hbm [resolvable:$true] %s82
      %s84 = sshll.u32 [#allocation10], 4
      %s85 = int_to_ptr.vmem [resolvable:$true] %s84
      %90 = dma.hbm_to_vmem [thread:$0]  %s83, 1024, %s85, [#allocation9], 64, 64, 4
    $region33: #{tpu_custom_call.1} parent=1 // pred_fallthru
      _
    // Predicated region
    $region34: #{tpu_custom_call.1} parent=1 // pred_check
      _
    $region35: #{tpu_custom_call.1} parent=1 // pred_check_branch
      %92 = sbr.rel (0) target = $region37
    $region36: #{tpu_custom_call.1} parent=1 // pred_region
      _
    $region37: #{tpu_custom_call.1} parent=1 // pred_fallthru
      _
    // Predicated region
    $region38: #{tpu_custom_call.1} parent=1 // pred_check
      _
    $region39: #{tpu_custom_call.1} parent=1 // pred_check_branch
      %94 = sbr.rel (0) target = $region41
    $region40: #{tpu_custom_call.1} parent=1 // pred_region
      %96 = vsyncadd [#allocation12], 0
      %s97 = sshll.u32 %s9, 4
      %s98 = int_to_ptr.hbm [resolvable:$true] %s97
      %s99 = sshll.u32 [#allocation11], 4
      %s100 = int_to_ptr.vmem [resolvable:$true] %s99
      %105 = dma.hbm_to_vmem [thread:$0]  %s98, 1024, %s100, [#allocation12], 64, 64, 4
    $region41: #{tpu_custom_call.1} parent=1 // pred_fallthru
      _
    // Predicated region
    $region42: #{tpu_custom_call.1} parent=1 // pred_check
      _
    $region43: #{tpu_custom_call.1} parent=1 // pred_check_branch
      %107 = sbr.rel (0) target = $region45
    $region44: #{tpu_custom_call.1} parent=1 // pred_region
      _
    $region45: #{tpu_custom_call.1} parent=1 // pred_fallthru
      _
    // Predicated region
    $region46: #{tpu_custom_call.1} parent=1 // pred_check
      _
    $region47: #{tpu_custom_call.1} parent=1 // pred_check_branch
      %109 = sbr.rel (0) target = $region49
    $region48: #{tpu_custom_call.1} parent=1 // pred_region
      _
    $region49: #{tpu_custom_call.1} parent=1 // pred_fallthru
      _
    // Predicated region
    $region50: #{tpu_custom_call.1} parent=1 // pred_check
      _
    $region51: #{tpu_custom_call.1} parent=1 // pred_check_branch
      %111 = sbr.rel (0) target = $region53
    $region52: #{tpu_custom_call.1} parent=1 // pred_region
      _
    $region53: #{tpu_custom_call.1} parent=1 // pred_fallthru
      _
    // Predicated region
    $region54: #{tpu_custom_call.1} parent=1 // pred_check
      _
    $region55: #{tpu_custom_call.1} parent=1 // pred_check_branch
      %113 = sbr.rel (0) target = $region57
    $region56: #{tpu_custom_call.1} parent=1 // pred_region
      %115 = dma.done [#allocation4], 128
    $region57: #{tpu_custom_call.1} parent=1 // pred_fallthru
      _
    // Predicated region
    $region58: #{tpu_custom_call.1} parent=1 // pred_check
      _
    $region59: #{tpu_custom_call.1} parent=1 // pred_check_branch
      %117 = sbr.rel (0) target = $region61
    $region60: #{tpu_custom_call.1} parent=1 // pred_region
      %119 = dma.done [#allocation6], 128
    $region61: #{tpu_custom_call.1} parent=1 // pred_fallthru
      _
    // Predicated region
    $region62: #{tpu_custom_call.1} parent=1 // pred_check
      _
    $region63: #{tpu_custom_call.1} parent=1 // pred_check_branch
      %121 = sbr.rel (0) target = $region65
    $region64: #{tpu_custom_call.1} parent=1 // pred_region
      %123 = dma.done [#allocation6], 128
    $region65: #{tpu_custom_call.1} parent=1 // pred_fallthru
      _
    // Predicated region
    $region66: #{tpu_custom_call.1} parent=1 // pred_check
      _
    $region67: #{tpu_custom_call.1} parent=1 // pred_check_branch
      %125 = sbr.rel (0) target = $region69
    $region68: #{tpu_custom_call.1} parent=1 // pred_region
      %127 = dma.done [#allocation9], 1024
    $region69: #{tpu_custom_call.1} parent=1 // pred_fallthru
      _
    // Predicated region
    $region70: #{tpu_custom_call.1} parent=1 // pred_check
      _
    $region71: #{tpu_custom_call.1} parent=1 // pred_check_branch
      %129 = sbr.rel (0) target = $region73
    $region72: #{tpu_custom_call.1} parent=1 // pred_region
      %131 = dma.done [#allocation9], 1024
    $region73: #{tpu_custom_call.1} parent=1 // pred_fallthru
      _
    // Predicated region
    $region74: #{tpu_custom_call.1} parent=1 // pred_check
      _
    $region75: #{tpu_custom_call.1} parent=1 // pred_check_branch
      %133 = sbr.rel (0) target = $region77
    $region76: #{tpu_custom_call.1} parent=1 // pred_region
      %135 = dma.done [#allocation12], 1024
    $region77: #{tpu_custom_call.1} parent=1 // pred_fallthru
      _
    %v137 = vld [vmem:[#allocation3] sm:$0xff]
    %v138 = vpack.c.bf16 %v137, %v137
    %v139 = vld [vmem:[#allocation5] sm:$0xff]
    %v140 = vpack.c.bf16 %v139, %v139
    %v141 = vld [vmem:[#allocation7] sm:$0xf]
    %v142 = vld [vmem:[#allocation7 + $0x4] sm:$0xf]
    %v143 = vld [vmem:[%s3] sm:$0xf]
    %vm144 = vcmask 64512
    %v146 = vsel %vm144, %v140, 0
    %vm148 = vcmask 1043456
    %v150 = vsel %vm148, %v143, 0
    %152 = vmatpush.bf16.msra.mxu0 0
    %153 = vmatpush.bf16.msra.mxu0 0
    %154 = vmatpush.bf16.msra.mxu0 0
    %155 = vmatpush.bf16.msra.mxu0 0
    %156 = vmatpush.bf16.msra.mxu0 0
    %157 = vmatpush.bf16.msra.mxu0 0
    %158 = vmatpush.bf16.msra.mxu0 0
    %159 = vmatpush.bf16.msra.mxu0 %v150
    %160 = vmatmul.bf16.gmra.mxu0 %v146
    %v161 = vpop.f32.mrf.mxu0
    %v162 = vadd.f32 0.0, %v161
    %v163 = vpop.f32.mrf.mxu0
    %164 = vdwg.mxu0
    %v167 = vunpack.c.l.b16 %v141
    %v168 = vunpack.c.l.b16 %v142
    %v169 = vpack.c.b16 %v168, %v167
    %vm171 = vcmask 130048
    %v173 = vsel %vm171, %v138, 0
    %175 = vmatpush.bf16.msra.mxu0 0
    %176 = vmatpush.bf16.msra.mxu0 0
    %177 = vmatpush.bf16.msra.mxu0 0
    %178 = vmatpush.bf16.msra.mxu0 0
    %179 = vmatpush.bf16.msra.mxu0 0
    %180 = vmatpush.bf16.msra.mxu0 0
    %181 = vmatpush.bf16.msra.mxu0 0
    %182 = vmatpush.bf16.msra.mxu0 %v169
    %183 = vmatmul.bf16.gmra.mxu0 %v173
    %v184 = vpop.f32.mrf.mxu0
    %v185 = vadd.f32 %v162, %v184
    %v186 = vpop.f32.mrf.mxu0
    %187 = vdwg.mxu0
    %v188 = vpack.c.bf16 %v185, %v185
    %v189 = vld [vmem:[%s4] sm:$0x1]
    %v191 = vpack.i.b16 %v189, %v189
    %v193 = vperm.slane %v191, 0
    %v194 = vunpack.c.l.bf16 %v188
    %v195 = vunpack.c.l.bf16 %v193
    %v196 = vadd.f32 %v194, %v195
    %v197 = vpack.c.bf16 %v196, %v196
    %v198 = vunpack.c.l.bf16 %v197
    %v199 = vmax.f32 %v198, 0.0
    %v200 = vpack.c.bf16 %v199, %v199
    %v201 = vld [vmem:[#allocation8] sm:$0xf]
    %v202 = vld [vmem:[#allocation8 + $0x4] sm:$0xf]
    %v203 = vld [vmem:[#allocation8 + $0x8] sm:$0xf]
    %v204 = vld [vmem:[#allocation8 + $0xc] sm:$0xf]
    %v205 = vld [vmem:[#allocation8 + $0x10] sm:$0xf]
    %v206 = vld [vmem:[#allocation8 + $0x14] sm:$0xf]
    %v207 = vld [vmem:[#allocation8 + $0x18] sm:$0xf]
    %v208 = vld [vmem:[#allocation8 + $0x1c] sm:$0xf]
    %v209 = vld [vmem:[#allocation8 + $0x20] sm:$0xf]
    %v210 = vld [vmem:[#allocation8 + $0x24] sm:$0xf]
    %v211 = vld [vmem:[#allocation8 + $0x28] sm:$0xf]
    %v212 = vld [vmem:[#allocation8 + $0x2c] sm:$0xf]
    %v213 = vld [vmem:[#allocation8 + $0x30] sm:$0xf]
    %v214 = vld [vmem:[#allocation8 + $0x34] sm:$0xf]
    %v215 = vld [vmem:[#allocation8 + $0x38] sm:$0xf]
    %v216 = vld [vmem:[#allocation8 + $0x3c] sm:$0xf]
    %v233 = vunpack.c.l.b16 %v201
    %v234 = vunpack.c.l.b16 %v202
    %v235 = vunpack.c.l.b16 %v203
    %v236 = vunpack.c.l.b16 %v204
    %v237 = vunpack.c.l.b16 %v205
    %v238 = vunpack.c.l.b16 %v206
    %v239 = vunpack.c.l.b16 %v207
    %v240 = vunpack.c.l.b16 %v208
    %v241 = vunpack.c.l.b16 %v209
    %v242 = vunpack.c.l.b16 %v210
    %v243 = vunpack.c.l.b16 %v211
    %v244 = vunpack.c.l.b16 %v212
    %v245 = vunpack.c.l.b16 %v213
    %v246 = vunpack.c.l.b16 %v214
    %v247 = vunpack.c.l.b16 %v215
    %v248 = vunpack.c.l.b16 %v216
    %v249 = vpack.c.b16 %v234, %v233
    %v250 = vpack.c.b16 %v236, %v235
    %v251 = vpack.c.b16 %v238, %v237
    %v252 = vpack.c.b16 %v240, %v239
    %v253 = vpack.c.b16 %v242, %v241
    %v254 = vpack.c.b16 %v244, %v243
    %v255 = vpack.c.b16 %v246, %v245
    %v256 = vpack.c.b16 %v248, %v247
    %265 = vmatpush.bf16.msra.mxu0 %v256
    %266 = vmatpush.bf16.msra.mxu0 %v255
    %267 = vmatpush.bf16.msra.mxu0 %v254
    %268 = vmatpush.bf16.msra.mxu0 %v253
    %269 = vmatpush.bf16.msra.mxu0 %v252
    %270 = vmatpush.bf16.msra.mxu0 %v251
    %271 = vmatpush.bf16.msra.mxu0 %v250
    %272 = vmatpush.bf16.msra.mxu0 %v249
    %273 = vmatmul.bf16.gmra.mxu0 %v200
    %v274 = vpop.f32.mrf.mxu0
    %v275 = vadd.f32 0.0, %v274
    %v276 = vpop.f32.mrf.mxu0
    %277 = vdwg.mxu0
    %v278 = vpack.c.bf16 %v275, %v275
    %v279 = vld [vmem:[%s6] sm:$0x1]
    %v281 = vpack.i.b16 %v279, %v279
    %v283 = vperm.slane %v281, 0
    %v284 = vunpack.c.l.bf16 %v278
    %v285 = vunpack.c.l.bf16 %v283
    %v286 = vadd.f32 %v284, %v285
    %v287 = vpack.c.bf16 %v286, %v286
    %v288 = vunpack.c.l.bf16 %v287
    %v289 = vmax.f32 %v288, 0.0
    %v290 = vpack.c.bf16 %v289, %v289
    %v291 = vld [vmem:[#allocation10] sm:$0xf]
    %v292 = vld [vmem:[#allocation10 + $0x4] sm:$0xf]
    %v293 = vld [vmem:[#allocation10 + $0x8] sm:$0xf]
    %v294 = vld [vmem:[#allocation10 + $0xc] sm:$0xf]
    %v295 = vld [vmem:[#allocation10 + $0x10] sm:$0xf]
    %v296 = vld [vmem:[#allocation10 + $0x14] sm:$0xf]
    %v297 = vld [vmem:[#allocation10 + $0x18] sm:$0xf]
    %v298 = vld [vmem:[#allocation10 + $0x1c] sm:$0xf]
    %v299 = vld [vmem:[#allocation10 + $0x20] sm:$0xf]
    %v300 = vld [vmem:[#allocation10 + $0x24] sm:$0xf]
    %v301 = vld [vmem:[#allocation10 + $0x28] sm:$0xf]
    %v302 = vld [vmem:[#allocation10 + $0x2c] sm:$0xf]
    %v303 = vld [vmem:[#allocation10 + $0x30] sm:$0xf]
    %v304 = vld [vmem:[#allocation10 + $0x34] sm:$0xf]
    %v305 = vld [vmem:[#allocation10 + $0x38] sm:$0xf]
    %v306 = vld [vmem:[#allocation10 + $0x3c] sm:$0xf]
    %v323 = vunpack.c.l.b16 %v291
    %v324 = vunpack.c.l.b16 %v292
    %v325 = vunpack.c.l.b16 %v293
    %v326 = vunpack.c.l.b16 %v294
    %v327 = vunpack.c.l.b16 %v295
    %v328 = vunpack.c.l.b16 %v296
    %v329 = vunpack.c.l.b16 %v297
    %v330 = vunpack.c.l.b16 %v298
    %v331 = vunpack.c.l.b16 %v299
    %v332 = vunpack.c.l.b16 %v300
    %v333 = vunpack.c.l.b16 %v301
    %v334 = vunpack.c.l.b16 %v302
    %v335 = vunpack.c.l.b16 %v303
    %v336 = vunpack.c.l.b16 %v304
    %v337 = vunpack.c.l.b16 %v305
    %v338 = vunpack.c.l.b16 %v306
    %v339 = vpack.c.b16 %v324, %v323
    %v340 = vpack.c.b16 %v326, %v325
    %v341 = vpack.c.b16 %v328, %v327
    %v342 = vpack.c.b16 %v330, %v329
    %v343 = vpack.c.b16 %v332, %v331
    %v344 = vpack.c.b16 %v334, %v333
    %v345 = vpack.c.b16 %v336, %v335
    %v346 = vpack.c.b16 %v338, %v337
    %355 = vmatpush.bf16.msra.mxu0 %v346
    %356 = vmatpush.bf16.msra.mxu0 %v345
    %357 = vmatpush.bf16.msra.mxu0 %v344
    %358 = vmatpush.bf16.msra.mxu0 %v343
    %359 = vmatpush.bf16.msra.mxu0 %v342
    %360 = vmatpush.bf16.msra.mxu0 %v341
    %361 = vmatpush.bf16.msra.mxu0 %v340
    %362 = vmatpush.bf16.msra.mxu0 %v339
    %363 = vmatmul.bf16.gmra.mxu0 %v290
    %v364 = vpop.f32.mrf.mxu0
    %v365 = vadd.f32 0.0, %v364
    %v366 = vpop.f32.mrf.mxu0
    %367 = vdwg.mxu0
    %v368 = vpack.c.bf16 %v365, %v365
    %v369 = vld [vmem:[%s8] sm:$0x1]
    %v371 = vpack.i.b16 %v369, %v369
    %v373 = vperm.slane %v371, 0
    %v374 = vunpack.c.l.bf16 %v368
    %v375 = vunpack.c.l.bf16 %v373
    %v376 = vadd.f32 %v374, %v375
    %v377 = vpack.c.bf16 %v376, %v376
    %v378 = vunpack.c.l.bf16 %v377
    %v379 = vmax.f32 %v378, 0.0
    %v380 = vpack.c.bf16 %v379, %v379
    %v381 = vld [vmem:[#allocation11] sm:$0xf]
    %v382 = vld [vmem:[#allocation11 + $0x4] sm:$0xf]
    %v383 = vld [vmem:[#allocation11 + $0x8] sm:$0xf]
    %v384 = vld [vmem:[#allocation11 + $0xc] sm:$0xf]
    %v385 = vld [vmem:[#allocation11 + $0x10] sm:$0xf]
    %v386 = vld [vmem:[#allocation11 + $0x14] sm:$0xf]
    %v387 = vld [vmem:[#allocation11 + $0x18] sm:$0xf]
    %v388 = vld [vmem:[#allocation11 + $0x1c] sm:$0xf]
    %v389 = vld [vmem:[#allocation11 + $0x20] sm:$0xf]
    %v390 = vld [vmem:[#allocation11 + $0x24] sm:$0xf]
    %v391 = vld [vmem:[#allocation11 + $0x28] sm:$0xf]
    %v392 = vld [vmem:[#allocation11 + $0x2c] sm:$0xf]
    %v393 = vld [vmem:[#allocation11 + $0x30] sm:$0xf]
    %v394 = vld [vmem:[#allocation11 + $0x34] sm:$0xf]
    %v395 = vld [vmem:[#allocation11 + $0x38] sm:$0xf]
    %v396 = vld [vmem:[#allocation11 + $0x3c] sm:$0xf]
    %v397 = vld [vmem:[%s10] sm:$0x1]
    %v399 = vperm.slane %v397, 0
    %v417 = vunpack.c.l.b16 %v381
    %v418 = vunpack.c.l.b16 %v382
    %v419 = vunpack.c.l.b16 %v383
    %v420 = vunpack.c.l.b16 %v384
    %v421 = vunpack.c.l.b16 %v385
    %v422 = vunpack.c.l.b16 %v386
    %v423 = vunpack.c.l.b16 %v387
    %v424 = vunpack.c.l.b16 %v388
    %v425 = vunpack.c.l.b16 %v389
    %v426 = vunpack.c.l.b16 %v390
    %v427 = vunpack.c.l.b16 %v391
    %v428 = vunpack.c.l.b16 %v392
    %v429 = vunpack.c.l.b16 %v393
    %v430 = vunpack.c.l.b16 %v394
    %v431 = vunpack.c.l.b16 %v395
    %v432 = vunpack.c.l.b16 %v396
    %v433 = vpack.c.b16 %v418, %v417
    %v434 = vpack.c.b16 %v420, %v419
    %v435 = vpack.c.b16 %v422, %v421
    %v436 = vpack.c.b16 %v424, %v423
    %v437 = vpack.c.b16 %v426, %v425
    %v438 = vpack.c.b16 %v428, %v427
    %v439 = vpack.c.b16 %v430, %v429
    %v440 = vpack.c.b16 %v432, %v431
    %449 = vmatpush.bf16.msra.mxu0 %v440
    %450 = vmatpush.bf16.msra.mxu0 %v439
    %451 = vmatpush.bf16.msra.mxu0 %v438
    %452 = vmatpush.bf16.msra.mxu0 %v437
    %453 = vmatpush.bf16.msra.mxu0 %v436
    %454 = vmatpush.bf16.msra.mxu0 %v435
    %455 = vmatpush.bf16.msra.mxu0 %v434
    %456 = vmatpush.bf16.msra.mxu0 %v433
    %457 = vmatmul.bf16.gmra.mxu0 %v380
    %v458 = vpop.f32.mrf.mxu0
    %v459 = vadd.f32 %v399, %v458
    %v460 = vpop.f32.mrf.mxu0
    %461 = vdwg.mxu0
    %v462 = vadd.f32 %v459, 3.0
    %v463 = vmax.f32 %v462, 0.0
    %v464 = vmin.f32 %v463, 6.0
    %v465 = vmul.f32 %v459, %v464
    %v466 = vld [vmem:[%s11] sm:$0x1]
    %v468 = vperm.slane %v466, 0
    %v470 = vmul.f32 %v465, %v468
    %471 = vadd.xlane.f32.xlu0 %v470
    %v472 = vpop.xlane.xlu0 %471
    %v473 = vld [vmem:[#allocation2] sm:$0x1]
    %v475 = vperm.slane %v473, 0
    %v477 = vadd.f32 %v472, %v475
    %vm478 = vcmask 7168
    %479 = vst.msk [vmem:[%s13] sm:$0xff] %vm478, %v477
    // Predicated region
    $region78: #{tpu_custom_call.1} parent=1 // pred_check
      _
    $region79: #{tpu_custom_call.1} parent=1 // pred_check_branch
      %481 = sbr.rel (0) target = $region81
    $region80: #{tpu_custom_call.1} parent=1 // pred_region
      _
    $region81: #{tpu_custom_call.1} parent=1 // pred_fallthru
      _
    // Predicated region
    $region82: #{tpu_custom_call.1} parent=1 // pred_check
      _
    $region83: #{tpu_custom_call.1} parent=1 // pred_check_branch
      %483 = sbr.rel (0) target = $region85
    $region84: #{tpu_custom_call.1} parent=1 // pred_region
      _
    $region85: #{tpu_custom_call.1} parent=1 // pred_fallthru
      _
    %484 = vsyncpa [#allocation4], 1
    %485 = vsyncpa [#allocation6], 1
    %486 = vsyncpa [#allocation9], 1
    %487 = vsyncpa [#allocation12], 1

</llo_original>
